<compile_context>
chip_gen: v7x
topology: tpu7x:2x2x1
jax: 0.10.0
libtpu: 0.0.40
codegen_flags: <defaults>
</compile_context>

<pallas_src>
import functools

import jax
import jax.numpy as jnp
from jax.experimental import pallas as pl
from jax.experimental.pallas import tpu as pltpu


def _round_up(v, m):
    return (v + m - 1) // m * m


def _vmem_capacity_bytes():
    """Per-core VMEM capacity; conservative default if the query fails."""
    try:
        info = pltpu.get_tpu_info()
        for name in ("vmem_capacity_bytes", "vmem_size_bytes", "vmem_bytes"):
            cap = getattr(info, name, None)
            if cap:
                return int(cap)
    except Exception:
        pass
    return 64 * 2**20  # v7x per-TensorCore VMEM; safe lower bound everywhere.


# ---------------------------------------------------------------------------
# Kernels
# ---------------------------------------------------------------------------
def _fused_gather_matmul_kernel(no_ref, x_ref, w_ref, b_ref, out_ref, *,
                                precision=None):
    """In-kernel neighbor gather + matmul (x resident in VMEM).

    no_ref:  (tm, 7)         int32 neighbor row indices for this row tile
    x_ref:   (N, C_in)       full, VMEM-resident vertex features
    w_ref:   (7, C_in, C_out) resident weight, slot-major
    b_ref:   (1, C_out)      f32 bias
    out_ref: (tm, C_out)
    """
    x = x_ref[...]
    idx = no_ref[...]
    acc = jnp.zeros(out_ref.shape, jnp.float32)
    for j in range(7):  # static unroll over the 7 one-ring slots
        rows = x.at[idx[:, j]].get(mode="promise_in_bounds")      # (tm, C_in)
        acc = acc + jnp.dot(rows, w_ref[j], precision=precision,
                            preferred_element_type=jnp.float32)
    out_ref[...] = (acc + b_ref[...]).astype(out_ref.dtype)


def _matmul_kernel(mat_ref, w_ref, b_ref, out_ref, *, precision=None):
    """(tm, 7*C_in) @ (7*C_in, C_out) + bias on a pre-gathered tile."""
    acc = jnp.dot(mat_ref[...], w_ref[...], precision=precision,
                  preferred_element_type=jnp.float32)
    out_ref[...] = (acc + b_ref[...]).astype(out_ref.dtype)


# ---------------------------------------------------------------------------
# pallas_call builders
# ---------------------------------------------------------------------------
@functools.partial(
    jax.jit,
    static_argnames=("tile_m", "compute_dtype", "fuse_gather",
                     "single_buffer_weights"))
def _forward_impl(x, neigh_orders, weight, bias, *, tile_m, compute_dtype,
                  fuse_gather, single_buffer_weights):
    n, c_in = x.shape
    c_out = weight.shape[0]
    k = 7 * c_in
    out_dtype = x.dtype
    out_isz = jnp.dtype(out_dtype).itemsize
    cdt = (jnp.dtype(compute_dtype) if compute_dtype is not None
           else jnp.dtype(x.dtype))
    csz = cdt.itemsize
    prec = jax.lax.Precision.HIGHEST if cdt == jnp.float32 else None

    # ---- generation-aware VMEM budget & row-tile solve (review item 5) ----
    budget = int(_vmem_capacity_bytes() * 0.75)
    min_sub = 16 if csz == 2 else 8
    tm = max(min_sub, min(_round_up(tile_m, min_sub), _round_up(n, min_sub)))

    def working_set(t):
        if fuse_gather:
            per_tile = 2 * (t * 7 * 4 + t * c_out * out_isz)        # idx+out, dbl buf
            per_tile += t * c_out * 4 + 7 * t * c_in * csz          # acc + gathered rows
            resident = n * c_in * csz + k * c_out * csz + c_out * 4
        else:
            per_tile = 2 * (t * k * csz + t * c_out * out_isz)      # mat+out, dbl buf
            wbuf = 1 if single_buffer_weights else 2
            resident = wbuf * (k * c_out * csz + c_out * 4)
        return per_tile + resident

    while tm > min_sub and working_set(tm) > budget:
        tm = _round_up(max(min_sub, tm // 2), min_sub)
    # v7x megacore: give the "parallel" row axis >= 2 tiles when possible (item 8).
    while pl.cdiv(n, tm) < 2 and tm > min_sub:
        tm = _round_up(max(min_sub, tm // 2), min_sub)
    grid_m = pl.cdiv(n, tm)
    vmem_limit = int(min(budget, max(16 * 2**20, 2 * working_set(tm))))

    def resident_spec(shape, index_map):
        # Constant-index (resident) operands: single-buffer them to halve their
        # VMEM footprint (review item 4).  If this Pallas version rejects
        # pipeline_mode / Buffered(1), the dispatcher falls back.
        if single_buffer_weights:
            return pl.BlockSpec(shape, index_map, pipeline_mode=pl.Buffered(1))
        return pl.BlockSpec(shape, index_map)

    xc = x.astype(cdt)
    b2 = bias.astype(jnp.float32).reshape(1, c_out)
    neigh = neigh_orders.astype(jnp.int32)

    compiler_params = pltpu.CompilerParams(
        dimension_semantics=("parallel",),
        vmem_limit_bytes=vmem_limit,
    )

    if fuse_gather:
        # Route (a): x resident in VMEM, (tm, 7) index tile, in-kernel gather.
        w3 = weight.reshape(c_out, 7, c_in).transpose(1, 2, 0).astype(cdt)
        neigh2d = neigh.reshape(n, 7)
        pad = grid_m * tm - n
        if pad:
            neigh2d = jnp.pad(neigh2d, ((0, pad), (0, 0)))  # pad with valid row 0
        cost = pl.CostEstimate(
            flops=2 * n * k * c_out, transcendentals=0,
            bytes_accessed=int(n * c_in * csz + 7 * n * 4 + k * c_out * csz
                               + n * c_out * out_isz))
        return pl.pallas_call(
            functools.partial(_fused_gather_matmul_kernel, precision=prec),
            out_shape=jax.ShapeDtypeStruct((n, c_out), out_dtype),
            grid_spec=pltpu.PrefetchScalarGridSpec(
                num_scalar_prefetch=0,
                grid=(grid_m,),
                in_specs=[
                    pl.BlockSpec((tm, 7), lambda i: (i, 0)),        # index tile
                    resident_spec((n, c_in), lambda i: (0, 0)),     # x (resident)
                    resident_spec((7, c_in, c_out), lambda i: (0, 0, 0)),
                    resident_spec((1, c_out), lambda i: (0, 0)),    # bias
                ],
                out_specs=pl.BlockSpec((tm, c_out), lambda i: (i, 0)),
            ),
            compiler_params=compiler_params,
            cost_estimate=cost,
        )(neigh2d, xc, w3, b2)

    # Fallback: gather once on the XLA side (materialises mat in HBM), then a
    # row-tiled MXU matmul with a resident weight.  Output block is unpadded /
    # full-width -> no post-kernel slice pass (review item 7).
    mat = xc[neigh].reshape(n, k)
    w_t = weight.T.astype(cdt)                                      # (7*C_in, C_out)
    cost = pl.CostEstimate(
        flops=2 * n * k * c_out, transcendentals=0,
        bytes_accessed=int(n * k * csz + k * c_out * csz + n * c_out * out_isz))
    return pl.pallas_call(
        functools.partial(_matmul_kernel, precision=prec),
        out_shape=jax.ShapeDtypeStruct((n, c_out), out_dtype),
        grid_spec=pltpu.PrefetchScalarGridSpec(
            num_scalar_prefetch=0,
            grid=(grid_m,),
            in_specs=[
                pl.BlockSpec((tm, k), lambda i: (i, 0)),            # mat tile
                resident_spec((k, c_out), lambda i: (0, 0)),        # weight
                resident_spec((1, c_out), lambda i: (0, 0)),        # bias
            ],
            out_specs=pl.BlockSpec((tm, c_out), lambda i: (i, 0)),
        ),
        compiler_params=compiler_params,
        cost_estimate=cost,
    )(mat, w_t, b2)


# ---------------------------------------------------------------------------
# Public wrapper with a safe fallback ladder
# ---------------------------------------------------------------------------
_IMPL_CACHE = {}


def onering_conv_layer_forward(x, neigh_orders, weight, bias, *, tile_m=512,
                               compute_dtype=jnp.bfloat16):
    """Pallas TPU implementation of onering_conv_layer.forward.

    x:            (N, C_in) float
    neigh_orders: (7*N,) integer row indices into x
    weight:       (C_out, 7*C_in)  (torch nn.Linear.weight layout)
    bias:         (C_out,)
    returns:      (N, C_out) in x.dtype (f32 accumulation inside the kernel)
    """
    n, c_in = x.shape
    c_out = weight.shape[0]
    cdt = (jnp.dtype(compute_dtype) if compute_dtype is not None
           else jnp.dtype(x.dtype))
    key = (n, c_in, c_out, str(x.dtype), str(cdt), int(tile_m))

    cached = _IMPL_CACHE.get(key)
    if cached is not None:
        return _forward_impl(x, neigh_orders, weight, bias, tile_m=tile_m,
                             compute_dtype=compute_dtype, **cached)

    # Candidate configs, best first.  The fused in-kernel gather (route (a))
    # is only attempted when x + the weight comfortably fit in VMEM; every
    # later config is a safe fallback that always compiles.
    budget = _vmem_capacity_bytes()
    resident_bytes = (n * c_in + 7 * c_in * c_out) * cdt.itemsize
    candidates = []
    if resident_bytes <= budget // 8:
        candidates.append(dict(fuse_gather=True, single_buffer_weights=True))
        candidates.append(dict(fuse_gather=True, single_buffer_weights=False))
    candidates.append(dict(fuse_gather=False, single_buffer_weights=True))
    candidates.append(dict(fuse_gather=False, single_buffer_weights=False))

    last_err = None
    for cfg in candidates:
        try:
            out = _forward_impl(x, neigh_orders, weight, bias, tile_m=tile_m,
                                compute_dtype=compute_dtype, **cfg)
            out = jax.block_until_ready(out)
            _IMPL_CACHE[key] = cfg
            return out
        except Exception as err:      # lowering/compile failure -> next config
            last_err = err
    raise last_err


if __name__ == "__main__":
    # Small synthetic shapes consistent with the module.
    N = 16      # vertices
    C_IN = 4    # in_features
    C_OUT = 8   # out_features

    key = jax.random.PRNGKey(0)
    k_x, k_w, k_b, k_n = jax.random.split(key, 4)

    x = jax.random.normal(k_x, (N, C_IN), dtype=jnp.float32)

    # 7 neighbor indices per vertex; slot 0 is the vertex itself by convention.
    neigh_orders = jax.random.randint(k_n, (7 * N,), 0, N, dtype=jnp.int32)
    neigh_orders = (neigh_orders.reshape(N, 7)
                    .at[:, 0].set(jnp.arange(N, dtype=jnp.int32))).reshape(-1)

    fan_in = 7 * C_IN
    bound = 1.0 / (fan_in ** 0.5)
    weight = jax.random.uniform(k_w, (C_OUT, fan_in), minval=-bound,
                                maxval=bound, dtype=jnp.float32)
    bias = jax.random.uniform(k_b, (C_OUT,), minval=-bound, maxval=bound,
                              dtype=jnp.float32)

    # Reference (mirrors the PyTorch forward exactly).
    mat_ref = x[neigh_orders].reshape(N, 7 * C_IN)
    ref = mat_ref @ weight.T + bias

    # Default path: bf16 MXU inputs, f32 accumulation.
    out_bf16 = onering_conv_layer_forward(x, neigh_orders, weight, bias)
    out_bf16 = jax.block_until_ready(out_bf16)
    assert out_bf16.shape == (N, C_OUT)
    assert jnp.allclose(out_bf16, ref, atol=5e-2, rtol=5e-2)

    # Full-precision path (Precision.HIGHEST inside the kernel).
    out_f32 = onering_conv_layer_forward(x, neigh_orders, weight, bias,
                                         compute_dtype=jnp.float32)
    out_f32 = jax.block_until_ready(out_f32)
    assert out_f32.shape == (N, C_OUT)
    assert jnp.allclose(out_f32, ref, atol=2e-2, rtol=2e-2)

    print("KERNEL_OK")
</pallas_src>

<mosaic_0001>
module attributes {stable_mosaic.version = 11 : i64} {
  func.func @_matmul_kernel(%arg0: i32, %arg1: memref<16x28xbf16, #tpu.memory_space<vmem>>, %arg2: memref<28x8xbf16, #tpu.memory_space<vmem>>, %arg3: memref<1x8xf32, #tpu.memory_space<vmem>>, %arg4: memref<16x8xf32, #tpu.memory_space<vmem>>) attributes {dimension_semantics = [#tpu.dimension_semantics<parallel>], iteration_bounds = array<i64: 1>, scalar_prefetch = 0 : i64, scratch_operands = 0 : i64, tpu.core_type = #tpu.core_type<tc>, window_params = [{transform_indices = @transform_0, window_bounds = array<i64: 16, 28>}, {pipeline_mode = #tpu.pipeline_mode<synchronous>, transform_indices = @transform_1, window_bounds = array<i64: 28, 8>}, {pipeline_mode = #tpu.pipeline_mode<synchronous>, transform_indices = @transform_2, window_bounds = array<i64: 1, 8>}, {transform_indices = @transform_3, window_bounds = array<i64: 16, 8>}]} {
    %c0 = arith.constant 0 : index
    %c0_0 = arith.constant 0 : index
    %0 = vector.load %arg1[%c0, %c0_0] : memref<16x28xbf16, #tpu.memory_space<vmem>>, vector<16x28xbf16>
    %c0_1 = arith.constant 0 : index
    %c0_2 = arith.constant 0 : index
    %1 = vector.load %arg2[%c0_1, %c0_2] : memref<28x8xbf16, #tpu.memory_space<vmem>>, vector<28x8xbf16>
    %cst = arith.constant dense<0.000000e+00> : vector<16x8xf32>
    %2 = tpu.matmul %0, %1, %cst {dimension_numbers = #tpu.dot_dimension_numbers<[1], [0], [0], [1], [0, 0, 1, 1], [], []>} : vector<16x28xbf16>, vector<28x8xbf16>, vector<16x8xf32> -> vector<16x8xf32>
    %c0_3 = arith.constant 0 : index
    %c0_4 = arith.constant 0 : index
    %3 = vector.load %arg3[%c0_3, %c0_4] : memref<1x8xf32, #tpu.memory_space<vmem>>, vector<1x8xf32>
    %4 = vector.broadcast %3 : vector<1x8xf32> to vector<16x8xf32>
    %5 = arith.addf %2, %4 : vector<16x8xf32>
    %c0_5 = arith.constant 0 : index
    %c0_6 = arith.constant 0 : index
    %6 = vector.load %arg4[%c0_5, %c0_6] : memref<16x8xf32, #tpu.memory_space<vmem>>, vector<16x8xf32>
    tpu.vector_store %arg4[%c0_5, %c0_6], %5 {strides = array<i32>} : memref<16x8xf32, #tpu.memory_space<vmem>>, vector<16x8xf32>,
    return
  }
  func.func @transform_0(%arg0: i32) -> (i32, i32) {
    %c0_i32 = arith.constant 0 : i32
    %c0_i32_0 = arith.constant 0 : i32
    return %arg0, %c0_i32 : i32, i32
  }
  func.func @transform_1(%arg0: i32) -> (i32, i32) {
    %c0_i32 = arith.constant 0 : i32
    %c0_i32_0 = arith.constant 0 : i32
    %c0_i32_1 = arith.constant 0 : i32
    return %c0_i32, %c0_i32_0 : i32, i32
  }
  func.func @transform_2(%arg0: i32) -> (i32, i32) {
    %c0_i32 = arith.constant 0 : i32
    %c0_i32_0 = arith.constant 0 : i32
    %c0_i32_1 = arith.constant 0 : i32
    return %c0_i32, %c0_i32_0 : i32, i32
  }
  func.func @transform_3(%arg0: i32) -> (i32, i32) {
    %c0_i32 = arith.constant 0 : i32
    %c0_i32_0 = arith.constant 0 : i32
    return %arg0, %c0_i32 : i32, i32
  }
}

module attributes {stable_mosaic.version = 11 : i64} {
  func.func @_matmul_kernel(%arg0: i32, %arg1: memref<16x28xbf16, #tpu.memory_space<vmem>>, %arg2: memref<28x8xbf16, #tpu.memory_space<vmem>>, %arg3: memref<1x8xf32, #tpu.memory_space<vmem>>, %arg4: memref<16x8xf32, #tpu.memory_space<vmem>>) attributes {dimension_semantics = [#tpu.dimension_semantics<parallel>], iteration_bounds = array<i64: 1>, scalar_prefetch = 0 : i64, scratch_operands = 0 : i64, tpu.core_type = #tpu.core_type<tc>, window_params = [{transform_indices = @transform_0, window_bounds = array<i64: 16, 28>}, {pipeline_mode = #tpu.pipeline_mode<synchronous>, transform_indices = @transform_1, window_bounds = array<i64: 28, 8>}, {pipeline_mode = #tpu.pipeline_mode<synchronous>, transform_indices = @transform_2, window_bounds = array<i64: 1, 8>}, {transform_indices = @transform_3, window_bounds = array<i64: 16, 8>}]} {
    %c0 = arith.constant 0 : index
    %c0_0 = arith.constant 0 : index
    %0 = vector.load %arg1[%c0, %c0_0] : memref<16x28xbf16, #tpu.memory_space<vmem>>, vector<16x28xbf16>
    %c0_1 = arith.constant 0 : index
    %c0_2 = arith.constant 0 : index
    %1 = vector.load %arg2[%c0_1, %c0_2] : memref<28x8xbf16, #tpu.memory_space<vmem>>, vector<28x8xbf16>
    %cst = arith.constant dense<0.000000e+00> : vector<16x8xf32>
    %2 = tpu.matmul %0, %1, %cst {dimension_numbers = #tpu.dot_dimension_numbers<[1], [0], [0], [1], [0, 0, 1, 1], [], []>} : vector<16x28xbf16>, vector<28x8xbf16>, vector<16x8xf32> -> vector<16x8xf32>
    %c0_3 = arith.constant 0 : index
    %c0_4 = arith.constant 0 : index
    %3 = vector.load %arg3[%c0_3, %c0_4] : memref<1x8xf32, #tpu.memory_space<vmem>>, vector<1x8xf32>
    %4 = vector.broadcast %3 : vector<1x8xf32> to vector<16x8xf32>
    %5 = arith.addf %2, %4 : vector<16x8xf32>
    %c0_5 = arith.constant 0 : index
    %c0_6 = arith.constant 0 : index
    %6 = vector.load %arg4[%c0_5, %c0_6] : memref<16x8xf32, #tpu.memory_space<vmem>>, vector<16x8xf32>
    tpu.vector_store %arg4[%c0_5, %c0_6], %5 {strides = array<i32>} : memref<16x8xf32, #tpu.memory_space<vmem>>, vector<16x8xf32>,
    return
  }
  func.func @transform_0(%arg0: i32) -> (i32, i32) {
    %c0_i32 = arith.constant 0 : i32
    %c0_i32_0 = arith.constant 0 : i32
    return %arg0, %c0_i32 : i32, i32
  }
  func.func @transform_1(%arg0: i32) -> (i32, i32) {
    %c0_i32 = arith.constant 0 : i32
    %c0_i32_0 = arith.constant 0 : i32
    %c0_i32_1 = arith.constant 0 : i32
    return %c0_i32, %c0_i32_0 : i32, i32
  }
  func.func @transform_2(%arg0: i32) -> (i32, i32) {
    %c0_i32 = arith.constant 0 : i32
    %c0_i32_0 = arith.constant 0 : i32
    %c0_i32_1 = arith.constant 0 : i32
    return %c0_i32, %c0_i32_0 : i32, i32
  }
  func.func @transform_3(%arg0: i32) -> (i32, i32) {
    %c0_i32 = arith.constant 0 : i32
    %c0_i32_0 = arith.constant 0 : i32
    return %arg0, %c0_i32 : i32, i32
  }
}

</mosaic_0001>

<llo_original>
// kernel: _forward_impl.1
$region0: #{_forward_impl.1}
  #allocation0 [shape = 'u32[]', space=smem, size = 0x4, offset = 0x4, fixed_abs, tag = 'smem constant byte address 0x4 - core index']
  #allocation1 [shape = 'u32[144,128]{1,0:T(1,128)}', space=vmem, size = 0x12000, scoped, tag = 'internal scratch']
  %s0 = inlined_call_operand.vmem [shape: bf16[16,28], index: 0, kind: input, shape index: {}]
  %s1 = inlined_call_operand.vmem [shape: bf16[28,8], index: 1, kind: input, shape index: {}]
  %s2 = inlined_call_operand.vmem [shape: f32[1,8], index: 2, kind: input, shape index: {}]
  %s3 = inlined_call_operand.vmem [shape: f32[16,8], index: 3, kind: output, shape index: {}]
  %s4 = sld [smem:[#allocation0]]
  $region22: #{_forward_impl.1} parent=0
    _
  %s6 = ssub.s32 1, %s4
  %s7 = scalar_select 0, %s6, %s4
  // Predicated region
  $region2: #{_forward_impl.1} parent=0 // pred_check
    _
  $region3: #{_forward_impl.1} parent=0 // pred_check_branch
    %9 = sbr.rel (0) target = $region5
  $region4: #{_forward_impl.1} parent=0 // pred_region
    _
  $region5: #{_forward_impl.1} parent=0 // pred_fallthru
    _
  // Predicated region
  $region6: #{_forward_impl.1} parent=0 // pred_check
    _
  $region7: #{_forward_impl.1} parent=0 // pred_check_branch
    %11 = sbr.rel (0) target = $region9
  $region8: #{_forward_impl.1} parent=0 // pred_region
    _
  $region9: #{_forward_impl.1} parent=0 // pred_fallthru
    _
  // Predicated region
  $region10: #{_forward_impl.1} parent=0 // pred_check
    _
  $region11: #{_forward_impl.1} parent=0 // pred_check_branch
    %13 = sbr.rel (0) target = $region13
  $region12: #{_forward_impl.1} parent=0 // pred_region
    _
  $region13: #{_forward_impl.1} parent=0 // pred_fallthru
    _
  %v15 = vld [vmem:[%s0] sm:$0xf]
  %v16 = vld [vmem:[%s0 + $0x4] sm:$0xf]
  %v17 = vld [vmem:[%s1] sm:$0xf]
  %v18 = vld [vmem:[%s1 + $0x4] sm:$0xf]
  %v19 = vld [vmem:[%s1 + $0x8] sm:$0xf]
  %v20 = vld [vmem:[%s1 + $0xc] sm:$0x3]
  %v21 = vld [vmem:[%s2] sm:$0x1]
  %v23 = vlaneseq
  %v24 = vshrl.u32 %v23, 7
  %v25 = vsub.s32 0, %v24
  %v26 = vrot.slane %v21, %v25
  %v30 = vunpack.c.l.b16 %v15
  %v31 = vunpack.c.l.b16 %v16
  %v32 = vpack.c.b16 %v31, %v30
  %v37 = vunpack.c.l.b16 %v17
  %v38 = vunpack.c.l.b16 %v18
  %v39 = vunpack.c.l.b16 %v19
  %v40 = vunpack.c.l.b16 %v20
  %v41 = vpack.c.b16 %v38, %v37
  %v42 = vpack.c.b16 %v40, %v39
  %vm44 = vcmask 228352
  %v46 = vsel %vm44, %v32, 0
  %vm48 = vcmask 1045504
  %v50 = vsel %vm48, %v42, 0
  %52 = vmatprep.subr.bf16.mxu0 0
  %53 = vmatpush1.bf16.msra.mxu0 %v41
  %54 = vmatprep.subr.bf16.mxu0 0
  %55 = vmatpush1.bf16.msra.mxu0 %v50
  %56 = vmatprep.subr.bf16.mxu0 0
  %57 = vmatpush1.bf16.msra.mxu0 0
  %58 = vmatprep.subr.bf16.mxu0 0
  %59 = vmatpush1.bf16.msra.mxu0 0
  %60 = vmatprep.subr.bf16.mxu0 0
  %61 = vmatpush1.bf16.msra.mxu0 0
  %62 = vmatprep.subr.bf16.mxu0 0
  %63 = vmatpush1.bf16.msra.mxu0 0
  %64 = vmatprep.subr.bf16.mxu0 0
  %65 = vmatpush1.bf16.msra.mxu0 0
  %66 = vmatprep.subr.bf16.mxu0 0
  %67 = vmatpush1.bf16.msra.mxu0 0
  %68 = vmatprep.subr.bf16.mxu0 0
  %69 = vmatpush1.bf16.msra.mxu0 0
  %70 = vmatprep.subr.bf16.mxu0 0
  %71 = vmatpush1.bf16.msra.mxu0 0
  %72 = vmatprep.subr.bf16.mxu0 0
  %73 = vmatpush1.bf16.msra.mxu0 0
  %74 = vmatprep.subr.bf16.mxu0 0
  %75 = vmatpush1.bf16.msra.mxu0 0
  %76 = vmatprep.subr.bf16.mxu0 0
  %77 = vmatpush1.bf16.msra.mxu0 0
  %78 = vmatprep.subr.bf16.mxu0 0
  %79 = vmatpush1.bf16.msra.mxu0 0
  %80 = vmatprep.subr.bf16.mxu0 0
  %81 = vmatpush1.bf16.msra.mxu0 0
  %82 = vmatprep.subr.bf16.mxu0 0
  %83 = vmatpush1.bf16.msra.mxu0 0
  %84 = vmatprep.mubr.bf16.mxu0 0
  %85 = vmatmul.mubr.bf16.gmra.mrb[0].mxu0 %v46
  %v86 = vpop.f32.mrb[0].mxu0
  %v87 = vadd.f32 %v26, %v86
  %v88 = vpop.f32.mrb[0].mxu0
  %v89 = vpop.f32.mrb[0].mxu0
  %v90 = vadd.f32 %v26, %v89
  %v91 = vpop.f32.mrb[0].mxu0
  %92 = vdwg.mxu0
  %vm93 = vcmask 64512
  %94 = vst.msk [vmem:[%s3] sm:$0xff] %vm93, %v87
  %95 = vst.msk [vmem:[%s3 + $0x8] sm:$0xff] %vm93, %v90
  // Predicated region
  $region14: #{_forward_impl.1} parent=0 // pred_check
    _
  $region15: #{_forward_impl.1} parent=0 // pred_check_branch
    %97 = sbr.rel (0) target = $region17
  $region16: #{_forward_impl.1} parent=0 // pred_region
    _
  $region17: #{_forward_impl.1} parent=0 // pred_fallthru
    _
  // Predicated region
  $region18: #{_forward_impl.1} parent=0 // pred_check
    _
  $region19: #{_forward_impl.1} parent=0 // pred_check_branch
    %99 = sbr.rel (0) target = $region21
  $region20: #{_forward_impl.1} parent=0 // pred_region
    _
  $region21: #{_forward_impl.1} parent=0 // pred_fallthru
    _

// kernel: _forward_impl.1
$region0: #{_forward_impl.1}
  #allocation0 [shape = 'u32[]', space=smem, size = 0x4, offset = 0x4, fixed_abs, tag = 'smem constant byte address 0x4 - core index']
  #allocation1 [shape = 'u32[144,128]{1,0:T(1,128)}', space=vmem, size = 0x12000, scoped, tag = 'internal scratch']
  %s0 = inlined_call_operand.vmem [shape: bf16[16,28], index: 0, kind: input, shape index: {}]
  %s1 = inlined_call_operand.vmem [shape: bf16[28,8], index: 1, kind: input, shape index: {}]
  %s2 = inlined_call_operand.vmem [shape: f32[1,8], index: 2, kind: input, shape index: {}]
  %s3 = inlined_call_operand.vmem [shape: f32[16,8], index: 3, kind: output, shape index: {}]
  %s4 = sld [smem:[#allocation0]]
  $region22: #{_forward_impl.1} parent=0
    _
  %s6 = ssub.s32 1, %s4
  %s7 = scalar_select 0, %s6, %s4
  // Predicated region
  $region2: #{_forward_impl.1} parent=0 // pred_check
    _
  $region3: #{_forward_impl.1} parent=0 // pred_check_branch
    %9 = sbr.rel (0) target = $region5
  $region4: #{_forward_impl.1} parent=0 // pred_region
    _
  $region5: #{_forward_impl.1} parent=0 // pred_fallthru
    _
  // Predicated region
  $region6: #{_forward_impl.1} parent=0 // pred_check
    _
  $region7: #{_forward_impl.1} parent=0 // pred_check_branch
    %11 = sbr.rel (0) target = $region9
  $region8: #{_forward_impl.1} parent=0 // pred_region
    _
  $region9: #{_forward_impl.1} parent=0 // pred_fallthru
    _
  // Predicated region
  $region10: #{_forward_impl.1} parent=0 // pred_check
    _
  $region11: #{_forward_impl.1} parent=0 // pred_check_branch
    %13 = sbr.rel (0) target = $region13
  $region12: #{_forward_impl.1} parent=0 // pred_region
    _
  $region13: #{_forward_impl.1} parent=0 // pred_fallthru
    _
  %v15 = vld [vmem:[%s0] sm:$0xf]
  %v16 = vld [vmem:[%s0 + $0x4] sm:$0xf]
  %v17 = vld [vmem:[%s1] sm:$0xf]
  %v18 = vld [vmem:[%s1 + $0x4] sm:$0xf]
  %v19 = vld [vmem:[%s1 + $0x8] sm:$0xf]
  %v20 = vld [vmem:[%s1 + $0xc] sm:$0x3]
  %v21 = vld [vmem:[%s2] sm:$0x1]
  %v23 = vlaneseq
  %v24 = vshrl.u32 %v23, 7
  %v25 = vsub.s32 0, %v24
  %v26 = vrot.slane %v21, %v25
  %v30 = vunpack.c.l.b16 %v15
  %v31 = vunpack.c.l.b16 %v16
  %v32 = vpack.c.b16 %v31, %v30
  %v37 = vunpack.c.l.b16 %v17
  %v38 = vunpack.c.l.b16 %v18
  %v39 = vunpack.c.l.b16 %v19
  %v40 = vunpack.c.l.b16 %v20
  %v41 = vpack.c.b16 %v38, %v37
  %v42 = vpack.c.b16 %v40, %v39
  %vm44 = vcmask 228352
  %v46 = vsel %vm44, %v32, 0
  %vm48 = vcmask 1045504
  %v50 = vsel %vm48, %v42, 0
  %52 = vmatprep.subr.bf16.mxu0 0
  %53 = vmatpush1.bf16.msra.mxu0 %v41
  %54 = vmatprep.subr.bf16.mxu0 0
  %55 = vmatpush1.bf16.msra.mxu0 %v50
  %56 = vmatprep.subr.bf16.mxu0 0
  %57 = vmatpush1.bf16.msra.mxu0 0
  %58 = vmatprep.subr.bf16.mxu0 0
  %59 = vmatpush1.bf16.msra.mxu0 0
  %60 = vmatprep.subr.bf16.mxu0 0
  %61 = vmatpush1.bf16.msra.mxu0 0
  %62 = vmatprep.subr.bf16.mxu0 0
  %63 = vmatpush1.bf16.msra.mxu0 0
  %64 = vmatprep.subr.bf16.mxu0 0
  %65 = vmatpush1.bf16.msra.mxu0 0
  %66 = vmatprep.subr.bf16.mxu0 0
  %67 = vmatpush1.bf16.msra.mxu0 0
  %68 = vmatprep.subr.bf16.mxu0 0
  %69 = vmatpush1.bf16.msra.mxu0 0
  %70 = vmatprep.subr.bf16.mxu0 0
  %71 = vmatpush1.bf16.msra.mxu0 0
  %72 = vmatprep.subr.bf16.mxu0 0
  %73 = vmatpush1.bf16.msra.mxu0 0
  %74 = vmatprep.subr.bf16.mxu0 0
  %75 = vmatpush1.bf16.msra.mxu0 0
  %76 = vmatprep.subr.bf16.mxu0 0
  %77 = vmatpush1.bf16.msra.mxu0 0
  %78 = vmatprep.subr.bf16.mxu0 0
  %79 = vmatpush1.bf16.msra.mxu0 0
  %80 = vmatprep.subr.bf16.mxu0 0
  %81 = vmatpush1.bf16.msra.mxu0 0
  %82 = vmatprep.subr.bf16.mxu0 0
  %83 = vmatpush1.bf16.msra.mxu0 0
  %84 = vmatprep.mubr.bf16.mxu0 0
  %85 = vmatmul.mubr.bf16.gmra.mrb[0].mxu0 %v46
  %v86 = vpop.f32.mrb[0].mxu0
  %v87 = vadd.f32 %v26, %v86
  %v88 = vpop.f32.mrb[0].mxu0
  %v89 = vpop.f32.mrb[0].mxu0
  %v90 = vadd.f32 %v26, %v89
  %v91 = vpop.f32.mrb[0].mxu0
  %92 = vdwg.mxu0
  %vm93 = vcmask 64512
  %94 = vst.msk [vmem:[%s3] sm:$0xff] %vm93, %v87
  %95 = vst.msk [vmem:[%s3 + $0x8] sm:$0xff] %vm93, %v90
  // Predicated region
  $region14: #{_forward_impl.1} parent=0 // pred_check
    _
  $region15: #{_forward_impl.1} parent=0 // pred_check_branch
    %97 = sbr.rel (0) target = $region17
  $region16: #{_forward_impl.1} parent=0 // pred_region
    _
  $region17: #{_forward_impl.1} parent=0 // pred_fallthru
    _
  // Predicated region
  $region18: #{_forward_impl.1} parent=0 // pred_check
    _
  $region19: #{_forward_impl.1} parent=0 // pred_check_branch
    %99 = sbr.rel (0) target = $region21
  $region20: #{_forward_impl.1} parent=0 // pred_region
    _
  $region21: #{_forward_impl.1} parent=0 // pred_fallthru
    _

</llo_original>
